<compile_context>
chip_gen: v6e
topology: v6e:2x2x1
jax: 0.10.0
libtpu: 0.0.40
codegen_flags: <defaults>
</compile_context>

<pallas_src>
import jax
import jax.numpy as jnp
from jax.experimental import pallas as pl
from jax.experimental.pallas import tpu as pltpu


# --------------------------------------------------------------------------------------
# Kernels
# --------------------------------------------------------------------------------------

def _identity_dma_kernel(x_hbm, o_hbm, sem):
    # EarlyFusion.forward(x) == x : one HBM->HBM DMA descriptor, no VMEM staging.
    cp = pltpu.make_async_copy(x_hbm, o_hbm, sem)
    cp.start()
    cp.wait()


def _identity_tile_kernel(x_ref, o_ref):
    # Tiled fallback: copy the row tile through VMEM unchanged.
    o_ref[...] = x_ref[...]


# --------------------------------------------------------------------------------------
# Wrapper
# --------------------------------------------------------------------------------------

def early_fusion_forward(x, *, skip_kernel=False, single_dma=True, row_tile=None):
    """Identity forward of EarlyFusion.

    x: [B, F] float32 feature matrix (modalities already concatenated along F).

    skip_kernel=True  -> return x directly (zero cost; preferred when no copy is needed).
    single_dma=True   -> one HBM->HBM DMA (default kernel path).
    single_dma=False  -> tiled VMEM copy with large, VMEM-budgeted row tiles.
    """
    if skip_kernel:
        return x

    B, F = x.shape
    itemsize = jnp.dtype(x.dtype).itemsize
    cost = pl.CostEstimate(flops=0, transcendentals=0, bytes_accessed=2 * B * F * itemsize)

    if single_dma:
        return pl.pallas_call(
            _identity_dma_kernel,
            out_shape=jax.ShapeDtypeStruct((B, F), x.dtype),
            in_specs=[pl.BlockSpec(memory_space=pl.ANY)],
            out_specs=pl.BlockSpec(memory_space=pl.ANY),
            scratch_shapes=[pltpu.SemaphoreType.DMA],
            cost_estimate=cost,
        )(x)

    # ---- Tiled VMEM path ----------------------------------------------------------
    if row_tile is None:
        # Target ~4 MiB per block: 2 specs x 2 pipeline buffers x 4 MiB = 16 MiB,
        # which clears v7x's 32 MiB scoped VMEM with headroom.
        target_block_bytes = 4 * 1024 * 1024
        row_tile = max(1, target_block_bytes // max(1, F * itemsize))
    row_tile = int(min(row_tile, B))
    if row_tile >= 8:
        row_tile = (row_tile // 8) * 8  # sublane-aligned; else row_tile == B (< 8) is allowed

    grid = (pl.cdiv(B, row_tile),)

    block_bytes = row_tile * F * itemsize
    needed = 4 * block_bytes  # 2 specs x double buffering
    cp_kwargs = {"dimension_semantics": ("parallel",)}  # only matters on v7x (2 TCs)
    if needed > 12 * 1024 * 1024:
        # Above v5e's 16 MiB scoped default (with margin) -> raise the limit explicitly.
        cp_kwargs["vmem_limit_bytes"] = int(min(2 * needed, 64 * 1024 * 1024))

    return pl.pallas_call(
        _identity_tile_kernel,
        out_shape=jax.ShapeDtypeStruct((B, F), x.dtype),
        grid=grid,
        # Full-width in F: lane-dense (unmasked vst) when F % 128 == 0; otherwise
        # full-extent blocks keep boundary handling correct via masked stores.
        in_specs=[pl.BlockSpec((row_tile, F), lambda i: (i, 0))],
        out_specs=pl.BlockSpec((row_tile, F), lambda i: (i, 0)),
        compiler_params=pltpu.CompilerParams(**cp_kwargs),
        cost_estimate=cost,
    )(x)


# --------------------------------------------------------------------------------------
# Self-test
# --------------------------------------------------------------------------------------

if __name__ == "__main__":
    key0, key1 = jax.random.split(jax.random.PRNGKey(0))

    # Module constructor args (stored on the module, unused by EarlyFusion.forward):
    blocks = [list(range(0, 48)), list(range(48, 88)), list(range(88, 128))]
    _ = blocks  # forward ignores blocks / activation / dropout / hidden-layer config

    # Small lane-dense case: [B, F] with F a multiple of 128.
    B, F = 8, 128
    x = jax.random.normal(key0, (B, F), jnp.float32)
    ref = jnp.array(x)  # saved copy (robust even if alias/donation is added later)

    out_dma = jax.block_until_ready(early_fusion_forward(x, single_dma=True))
    assert out_dma.shape == ref.shape == (B, F)
    assert bool(jnp.array_equal(out_dma, ref)), "EarlyFusion identity mismatch (DMA path)"

    # Ragged case: B not a multiple of the row tile and F not a multiple of 128 —
    # exercises Pallas boundary masking on the tiled VMEM path.
    x2 = jax.random.normal(key1, (10, 96), jnp.float32)
    out_tiled = jax.block_until_ready(
        early_fusion_forward(x2, single_dma=False, row_tile=8)
    )
    assert out_tiled.shape == x2.shape
    assert bool(jnp.array_equal(out_tiled, x2)), "EarlyFusion identity mismatch (tiled path)"

    print("KERNEL_OK")
</pallas_src>

<mosaic_0001>
module attributes {stable_mosaic.version = 11 : i64} {
  func.func @_identity_dma_kernel(%arg0: memref<8x128xf32, #tpu.memory_space<any>>, %arg1: memref<8x128xf32, #tpu.memory_space<any>>, %arg2: memref<!tpu.dma_semaphore, #tpu.memory_space<semaphore_mem>>) attributes {dimension_semantics = [], scalar_prefetch = 0 : i64, scratch_operands = 1 : i64, tpu.core_type = #tpu.core_type<tc>} {
    tpu.enqueue_dma source(%arg0 : memref<8x128xf32, #tpu.memory_space<any>>) target(%arg1 : memref<8x128xf32, #tpu.memory_space<any>>) target_semaphore(%arg2 : memref<!tpu.dma_semaphore, #tpu.memory_space<semaphore_mem>>)
    tpu.wait_dma2 semaphore(%arg2 : memref<!tpu.dma_semaphore, #tpu.memory_space<semaphore_mem>>) src(%arg0 : memref<8x128xf32, #tpu.memory_space<any>>) dst(%arg1 : memref<8x128xf32, #tpu.memory_space<any>>)
    return
  }
}

</mosaic_0001>

<llo_original>
// kernel: tpu_custom_call.1
$region0: #{tpu_custom_call.1}
  #allocation0 [shape = 'u32[]', space=smem, size = 0x4, offset = 0x4, fixed_abs, tag = 'smem constant byte address 0x4 - core index']
  #allocation1 [shape = 'u32[144,128]{1,0:T(1,128)}', space=vmem, size = 0x12000, scoped, tag = 'internal scratch']
  #allocation2 [shape = 's32[1]{0}', space=sflag, size = 0x4, scoped, tag = 'scratch operand']
  #allocation3 [shape = 's32[]', space=sflag, size = 0x4, offset = 0, fixed_abs, tag = 'sflag constant byte address 0x0 - dummy sync flag']
  #allocation4 [shape = 'u32[0]{0}', space=smem, size = 0, offset = 0, fixed_abs, tag = 'smem constant byte address 0x0 - null']
  %s0 = inlined_call_operand.hbm [shape: f32[8,128], index: 0, kind: input, shape index: {}]
  %s1 = inlined_call_operand.hbm [shape: f32[8,128], index: 1, kind: output, shape index: {}]
  %s2 = sld [smem:[#allocation0]]
  $region2: #{tpu_custom_call.1} parent=0
    _
  %s4 = ssub.s32 1, %s2
  %s5 = scalar_select 0, %s4, %s2
  %s7 = sshll.u32 1, 14
  %s8 = sxor.u32 4294967295, %s7
  %12 = dma.general %s0, 128, %s1, [#allocation2], 131072, [#allocation4], 0, 0
  %s13 = smul.u32 8, 1
  %s14 = sshll.u32 %s13, 4
  %15 = dma.done [#allocation2], %s14
  %16 = vsyncmov [#allocation2]
  %s17 = vpop.sfrf %16
  %p18 = scmp.eq.s32.totalorder %s17, 0
  %p19 = pneg %p18
  %21 = shalt.err (%p19)

</llo_original>
